<compile_context>
chip_gen: v7x
topology: tpu7x:2x2x1
jax: 0.10.0
libtpu: 0.0.40
codegen_flags: <defaults>
</compile_context>

<pallas_src>
import functools

import jax
import jax.numpy as jnp
from jax.experimental import pallas as pl
from jax.experimental.pallas import tpu as pltpu


def _round_up(x: int, m: int) -> int:
    return ((x + m - 1) // m) * m


def _focal_loss_kernel(preds_ref, labels_ref, alpha_ref, out_ref, *, gamma: float):
    # out_ref block index is constant along the inner grid axis -> resident
    # per-part accumulator of per-lane partial sums.
    @pl.when(pl.program_id(1) == 0)
    def _():
        out_ref[...] = jnp.zeros_like(out_ref)

    x = preds_ref[...].astype(jnp.float32)        # (C, TILE_M)
    labels = labels_ref[...]                      # (1, TILE_M) int32
    alpha = alpha_ref[...]                        # (C, 1) float32

    # Numerically-stable log-softmax over the (small) class/sublane axis.
    m = jnp.max(x, axis=0, keepdims=True)                       # (1, TILE_M)
    z = x - m
    lse = jnp.log(jnp.sum(jnp.exp(z), axis=0, keepdims=True))   # (1, TILE_M)
    log_soft = z - lse                                          # (C, TILE_M)

    # One-hot gather of the target class via iota over the class axis.
    cls = jax.lax.broadcasted_iota(jnp.int32, x.shape, 0)       # (C, TILE_M)
    mask = (cls == labels).astype(jnp.float32)                  # (C, TILE_M)

    logp_t = jnp.sum(log_soft * mask, axis=0, keepdims=True)    # (1, TILE_M)
    a_t = jnp.sum(alpha * mask, axis=0, keepdims=True)          # (1, TILE_M)
    p_t = jnp.exp(logp_t)                                       # (1, TILE_M)

    om = jnp.maximum(1.0 - p_t, 0.0)
    if float(gamma) == 2.5:
        focal = om * om * jnp.sqrt(om)            # x^2.5 without log/exp pow
    else:
        focal = jnp.power(om, jnp.float32(gamma))

    # Padded rows (label == C) have an all-zero one-hot mask -> logp_t = 0,
    # a_t = 0, p_t = 1 -> contribution is exactly 0.
    per_row = -a_t * focal * logp_t               # (1, TILE_M) lane-dense
    out_ref[...] += per_row[None]                 # (1, 1, TILE_M)


def focal_loss(preds, labels, alpha_vec, *, gamma=2.5, size_average=True,
               max_tile_m=16384, num_parts=2):
    """preds: [..., C] float; labels: [...] int; alpha_vec: [C] float."""
    C = preds.shape[-1]
    preds2d = preds.reshape(-1, C)                    # native dtype, no upcast
    labels1d = labels.reshape(-1).astype(jnp.int32)
    M = preds2d.shape[0]

    # Lane-dense layout: classes on sublanes, rows on lanes.
    preds_t = jnp.transpose(preds2d)                  # (C, M)
    labels_t = labels1d.reshape(1, M)                 # (1, M)
    alpha2d = alpha_vec.reshape(C, 1).astype(jnp.float32)

    # Lane-dense tiles (multiple of 128), sized well under all VMEM limits.
    per_part = (M + num_parts - 1) // num_parts
    tile_m = min(int(max_tile_m), _round_up(max(per_part, 1), 128))
    m_pad = _round_up(M, tile_m * num_parts)
    if m_pad != M:
        pad = m_pad - M
        preds_t = jnp.pad(preds_t, ((0, 0), (0, pad)))
        # Out-of-range label => all-zero one-hot => zero loss contribution.
        labels_t = jnp.pad(labels_t, ((0, 0), (0, pad)), constant_values=C)
    blocks_per_part = m_pad // (tile_m * num_parts)

    kernel = functools.partial(_focal_loss_kernel, gamma=float(gamma))

    partials = pl.pallas_call(
        kernel,
        grid=(num_parts, blocks_per_part),
        in_specs=[
            pl.BlockSpec((C, tile_m),
                         lambda p, i: (0, p * blocks_per_part + i)),
            pl.BlockSpec((1, tile_m),
                         lambda p, i: (0, p * blocks_per_part + i)),
            pl.BlockSpec((C, 1), lambda p, i: (0, 0)),
        ],
        out_specs=pl.BlockSpec((1, 1, tile_m), lambda p, i: (p, 0, 0)),
        out_shape=jax.ShapeDtypeStruct((num_parts, 1, tile_m), jnp.float32),
        compiler_params=pltpu.CompilerParams(
            dimension_semantics=("parallel", "arbitrary")),
    )(preds_t, labels_t, alpha2d)

    total = jnp.sum(partials)
    if size_average:
        total = total / jnp.float32(M)
    return total


def _reference_focal_loss(preds, labels, alpha_vec, gamma=2.5, size_average=True):
    C = preds.shape[-1]
    preds2d = preds.reshape(-1, C).astype(jnp.float32)
    lab = labels.reshape(-1).astype(jnp.int32)
    logsoft = jax.nn.log_softmax(preds2d, axis=1)
    logp_t = jnp.take_along_axis(logsoft, lab[:, None], axis=1)[:, 0]
    p_t = jnp.exp(logp_t)
    a_t = alpha_vec[lab]
    loss = -a_t * jnp.power(1.0 - p_t, gamma) * logp_t
    return jnp.mean(loss) if size_average else jnp.sum(loss)


if __name__ == "__main__":
    # Deterministic setup matching FocalLoss(alpha=0.25, gamma=2.5, num_classes=4)
    num_classes = 4
    gamma = 2.5
    alpha_scalar = 0.25
    # alpha vector = [alpha, 1-alpha, 1-alpha, ...]
    alpha_vec = jnp.concatenate([
        jnp.array([alpha_scalar], dtype=jnp.float32),
        jnp.full((num_classes - 1,), 1.0 - alpha_scalar, dtype=jnp.float32),
    ])

    # Detection-style inputs: preds [B, N, C], labels [B, N]
    B, N, C = 2, 8, num_classes
    key = jax.random.PRNGKey(0)
    kp, kl = jax.random.split(key)
    preds = jax.random.normal(kp, (B, N, C), dtype=jnp.float32)
    labels = jax.random.randint(kl, (B, N), 0, C, dtype=jnp.int32)

    loss = focal_loss(preds, labels, alpha_vec, gamma=gamma, size_average=True)
    loss = jax.block_until_ready(loss)

    ref = _reference_focal_loss(preds, labels, alpha_vec, gamma=gamma,
                                size_average=True)
    assert jnp.allclose(loss, ref, rtol=2e-5, atol=1e-6), (loss, ref)

    print("KERNEL_OK")
</pallas_src>

<mosaic_0001>
module attributes {stable_mosaic.version = 11 : i64} {
  func.func @_focal_loss_kernel(%arg0: i32, %arg1: i32, %arg2: memref<4x128xf32, #tpu.memory_space<vmem>>, %arg3: memref<1x128xi32, #tpu.memory_space<vmem>>, %arg4: memref<4x1xf32, #tpu.memory_space<vmem>>, %arg5: memref<1x1x128xf32, #tpu.memory_space<vmem>>) attributes {dimension_semantics = [#tpu.dimension_semantics<parallel>, #tpu.dimension_semantics<arbitrary>], iteration_bounds = array<i64: 2, 1>, scalar_prefetch = 0 : i64, scratch_operands = 0 : i64, tpu.core_type = #tpu.core_type<tc>, window_params = [{transform_indices = @transform_0, window_bounds = array<i64: 4, 128>}, {transform_indices = @transform_1, window_bounds = array<i64: 1, 128>}, {pipeline_mode = #tpu.pipeline_mode<synchronous>, transform_indices = @transform_2, window_bounds = array<i64: 4, 1>}, {transform_indices = @transform_3, window_bounds = array<i64: 1, 1, 128>}]} {
    %c0_i32 = arith.constant 0 : i32
    %0 = arith.cmpi eq, %arg1, %c0_i32 : i32
    %1 = arith.extui %0 : i1 to i32
    %c0_i32_0 = arith.constant 0 : i32
    %2 = arith.cmpi ne, %1, %c0_i32_0 : i32
    scf.if %2 {
      %cst_18 = arith.constant 0.000000e+00 : f32
      %44 = vector.broadcast %cst_18 : f32 to vector<1x1x128xf32>
      %c0_19 = arith.constant 0 : index
      %c0_20 = arith.constant 0 : index
      %c0_21 = arith.constant 0 : index
      %45 = vector.load %arg5[%c0_19, %c0_20, %c0_21] : memref<1x1x128xf32, #tpu.memory_space<vmem>>, vector<1x1x128xf32>
      tpu.vector_store %arg5[%c0_19, %c0_20, %c0_21], %44 {strides = array<i32>} : memref<1x1x128xf32, #tpu.memory_space<vmem>>, vector<1x1x128xf32>,
    } else {
    }
    %c0 = arith.constant 0 : index
    %c0_1 = arith.constant 0 : index
    %3 = vector.load %arg2[%c0, %c0_1] : memref<4x128xf32, #tpu.memory_space<vmem>>, vector<4x128xf32>
    %c0_2 = arith.constant 0 : index
    %c0_3 = arith.constant 0 : index
    %4 = vector.load %arg3[%c0_2, %c0_3] : memref<1x128xi32, #tpu.memory_space<vmem>>, vector<1x128xi32>
    %c0_4 = arith.constant 0 : index
    %c0_5 = arith.constant 0 : index
    %5 = vector.load %arg4[%c0_4, %c0_5] : memref<4x1xf32, #tpu.memory_space<vmem>>, vector<4x1xf32>
    %cst = arith.constant dense<0xFF800000> : vector<128xf32>
    %6 = vector.multi_reduction <maximumf>, %3, %cst [0] : vector<4x128xf32> to vector<128xf32>
    %7 = vector.shape_cast %6 : vector<128xf32> to vector<1x128xf32>
    %8 = vector.broadcast %7 : vector<1x128xf32> to vector<4x128xf32>
    %9 = arith.subf %3, %8 : vector<4x128xf32>
    %10 = math.exp %9 : vector<4x128xf32>
    %cst_6 = arith.constant dense<0.000000e+00> : vector<128xf32>
    %11 = vector.multi_reduction <add>, %10, %cst_6 [0] : vector<4x128xf32> to vector<128xf32>
    %12 = vector.shape_cast %11 : vector<128xf32> to vector<1x128xf32>
    %13 = math.log %12 : vector<1x128xf32>
    %14 = vector.broadcast %13 : vector<1x128xf32> to vector<4x128xf32>
    %15 = arith.subf %9, %14 : vector<4x128xf32>
    %16 = tpu.iota {dimensions = array<i32: 0>} : vector<4x128xi32>
    %17 = vector.broadcast %4 : vector<1x128xi32> to vector<4x128xi32>
    %18 = arith.cmpi eq, %16, %17 : vector<4x128xi32>
    %19 = arith.extui %18 : vector<4x128xi1> to vector<4x128xi32>
    %20 = arith.sitofp %19 : vector<4x128xi32> to vector<4x128xf32>
    %21 = arith.mulf %15, %20 : vector<4x128xf32>
    %cst_7 = arith.constant dense<0.000000e+00> : vector<128xf32>
    %22 = vector.multi_reduction <add>, %21, %cst_7 [0] : vector<4x128xf32> to vector<128xf32>
    %23 = vector.shape_cast %22 : vector<128xf32> to vector<1x128xf32>
    %24 = vector.broadcast %5 : vector<4x1xf32> to vector<4x128xf32>
    %25 = arith.mulf %24, %20 : vector<4x128xf32>
    %cst_8 = arith.constant dense<0.000000e+00> : vector<128xf32>
    %26 = vector.multi_reduction <add>, %25, %cst_8 [0] : vector<4x128xf32> to vector<128xf32>
    %27 = vector.shape_cast %26 : vector<128xf32> to vector<1x128xf32>
    %28 = math.exp %23 : vector<1x128xf32>
    %cst_9 = arith.constant 1.000000e+00 : f32
    %29 = vector.broadcast %cst_9 : f32 to vector<1x128xf32>
    %30 = arith.subf %29, %28 : vector<1x128xf32>
    %cst_10 = arith.constant 0.000000e+00 : f32
    %31 = vector.broadcast %cst_10 : f32 to vector<1x128xf32>
    %32 = arith.maximumf %30, %31 : vector<1x128xf32>
    %33 = arith.mulf %32, %32 : vector<1x128xf32>
    %34 = math.sqrt %32 : vector<1x128xf32>
    %35 = arith.mulf %33, %34 : vector<1x128xf32>
    %cst_11 = arith.constant 0.000000e+00 : f32
    %36 = vector.broadcast %cst_11 : f32 to vector<1x128xf32>
    %37 = arith.subf %36, %27 : vector<1x128xf32>
    %38 = arith.mulf %37, %35 : vector<1x128xf32>
    %39 = arith.mulf %38, %23 : vector<1x128xf32>
    %c0_12 = arith.constant 0 : index
    %c0_13 = arith.constant 0 : index
    %c0_14 = arith.constant 0 : index
    %40 = vector.load %arg5[%c0_12, %c0_13, %c0_14] : memref<1x1x128xf32, #tpu.memory_space<vmem>>, vector<1x1x128xf32>
    %41 = vector.shape_cast %39 : vector<1x128xf32> to vector<1x1x128xf32>
    %42 = arith.addf %40, %41 : vector<1x1x128xf32>
    %c0_15 = arith.constant 0 : index
    %c0_16 = arith.constant 0 : index
    %c0_17 = arith.constant 0 : index
    %43 = vector.load %arg5[%c0_15, %c0_16, %c0_17] : memref<1x1x128xf32, #tpu.memory_space<vmem>>, vector<1x1x128xf32>
    tpu.vector_store %arg5[%c0_15, %c0_16, %c0_17], %42 {strides = array<i32>} : memref<1x1x128xf32, #tpu.memory_space<vmem>>, vector<1x1x128xf32>,
    return
  }
  func.func @transform_0(%arg0: i32, %arg1: i32) -> (i32, i32) {
    %c1_i32 = arith.constant 1 : i32
    %0 = arith.muli %arg0, %c1_i32 : i32
    %1 = arith.addi %0, %arg1 : i32
    %c0_i32 = arith.constant 0 : i32
    %c0_i32_0 = arith.constant 0 : i32
    return %c0_i32, %1 : i32, i32
  }
  func.func @transform_1(%arg0: i32, %arg1: i32) -> (i32, i32) {
    %c1_i32 = arith.constant 1 : i32
    %0 = arith.muli %arg0, %c1_i32 : i32
    %1 = arith.addi %0, %arg1 : i32
    %c0_i32 = arith.constant 0 : i32
    %c0_i32_0 = arith.constant 0 : i32
    return %c0_i32, %1 : i32, i32
  }
  func.func @transform_2(%arg0: i32, %arg1: i32) -> (i32, i32) {
    %c0_i32 = arith.constant 0 : i32
    %c0_i32_0 = arith.constant 0 : i32
    %c0_i32_1 = arith.constant 0 : i32
    return %c0_i32, %c0_i32_0 : i32, i32
  }
  func.func @transform_3(%arg0: i32, %arg1: i32) -> (i32, i32, i32) {
    %c0_i32 = arith.constant 0 : i32
    %c0_i32_0 = arith.constant 0 : i32
    %c0_i32_1 = arith.constant 0 : i32
    return %arg0, %c0_i32, %c0_i32_0 : i32, i32, i32
  }
}

</mosaic_0001>

<llo_original>
// kernel: tpu_custom_call.1
$region0: #{tpu_custom_call.1}
  #allocation0 [shape = 'u32[]', space=smem, size = 0x4, offset = 0x4, fixed_abs, tag = 'smem constant byte address 0x4 - core index']
  #allocation1 [shape = 'u32[144,128]{1,0:T(1,128)}', space=vmem, size = 0x12000, scoped, tag = 'internal scratch']
  %s0 = inlined_call_operand.hbm [shape: f32[4,256], index: 0, kind: input, shape index: {}]
  %s1 = inlined_call_operand.vmem [shape: s32[1,256], index: 1, kind: input, shape index: {}]
  %s2 = inlined_call_operand.vmem [shape: f32[4,1], index: 2, kind: input, shape index: {}]
  %s3 = inlined_call_operand.hbm [shape: f32[2,1,128], index: 3, kind: output, shape index: {}]
  %s4 = sld [smem:[#allocation0]]
  $region53: #{tpu_custom_call.1} parent=0
    _
  %s6 = ssub.s32 1, %s4
  %s7 = scalar_select 0, %s6, %s4
  $region1: #{tpu_custom_call.1} parent=0
    #allocation2 [shape = 'u8[4096]{0}', space=vmem, size = 0x1000, scoped, tag = 'input window, operand 0']
    #allocation3 [shape = 's32[2]{0}', space=sflag, size = 0x8, scoped, tag = 'scoped memory for tpu_custom_call.1']
    #allocation4 [shape = 's32[2]{0}', space=sflag, size = 0x8, scoped, tag = 'scoped memory for tpu_custom_call.1']
    #allocation5 [shape = 'u8[1024]{0}', space=vmem, size = 0x400, scoped, tag = 'output window, operand 0']
    %8 = vsyncpa [#allocation3], 0
    %s9 = scalar_lea.sflag [#allocation3], 1
    %10 = vsyncpa %s9, 0
    %11 = vsyncpa [#allocation4], 0
    %s12 = scalar_lea.sflag [#allocation4], 1
    %13 = vsyncpa %s12, 0
    loop: start=0, step=1, limit=4
    $region2: #{tpu_custom_call.1} parent=1 // loop_pre_header
      _
    $region3: #{tpu_custom_call.1} parent=1 // loop_header
      %s15 = sphi 0, %s19
      %p16 = scmp.ge.s32.totalorder %s15, 4
      %s22 = sphi 0, %s34
      %s23 = sphi 0, %s30
      %s24 = sphi 0, %s22
      %s25 = sphi 0, %s23
      %s26 = sphi 0, %s24
      %s27 = sphi 0, %s25
      %s39 = sphi 0, %s41
      %s42 = sphi 0, %s39
      %s43 = sphi 0, %s42
      %s59 = sphi 0, %s43
      %s67 = sphi 0, %s69
      %s70 = sphi 0, %s67
      %s71 = sphi 0, %s70
      %s87 = sphi 0, %s71
      %s91 = sphi 0, %s91
      %s93 = sphi 0, %s91
      %s94 = sphi 0, %s93
      %s108 = sphi 0, %s94
      %s114 = sphi 0, %s116
      %s117 = sphi 0, %s114
      %s118 = sphi 0, %s117
      %s134 = sphi 0, %s118
    $region4: #{tpu_custom_call.1} parent=1 // loop_header_branch
      %18 = sbr.rel (%p16) target = $region8
    $region5: #{tpu_custom_call.1} parent=1 // loop_body
      %s20 = ssub.s32 %s15, 1
      %s21 = ssub.s32 %s15, 2
      %s28 = sadd.s32 1, %s23
      %p29 = scmp.ge.s32.totalorder %s28, 1
      %s30 = scalar_select %p29, 0, %s28
      %s31 = sadd.s32 1, %s22
      %s32 = scalar_select %p29, %s31, %s22
      %p33 = scmp.ge.s32.totalorder %s32, 2
      %s34 = scalar_select %p33, 0, %s32
      %s35 = sadd.s32 %s22, %s23
      %s36 = sadd.s32 %s34, %s30
      %s37 = ssub.s32 %s35, %s36
      %p38 = scmp.eq.s32.totalorder %s37, 0
      %s40 = sadd.s32 %s39, 1
      %s41 = scalar_select %p38, %s39, %s40
      %p44 = pneg %p38
      %p45 = scmp.eq.s32.totalorder %s15, 1
      %p46 = por %p44, %p45
      %p47 = scmp.ne.s32.totalorder %s39, %s42
      %p48 = scmp.eq.s32.totalorder %s15, 0
      %p49 = por %p47, %p48
      %p50 = scmp.ne.s32.totalorder %s39, %s42
      %p51 = scmp.eq.s32.totalorder %s20, 1
      %p52 = por %p50, %p51
      %p53 = scmp.ne.s32.totalorder %s42, %s43
      %p54 = scmp.eq.s32.totalorder %s20, 0
      %p55 = por %p53, %p54
      %p56 = scmp.ne.s32.totalorder %s42, %s43
      %p57 = scmp.eq.s32.totalorder %s21, 1
      %p58 = por %p56, %p57
      %p60 = scmp.ne.s32.totalorder %s43, %s59
      %p61 = scmp.eq.s32.totalorder %s21, 0
      %p62 = por %p60, %p61
      %s63 = sadd.s32 %s22, %s23
      %s64 = sadd.s32 %s34, %s30
      %s65 = ssub.s32 %s63, %s64
      %p66 = scmp.eq.s32.totalorder %s65, 0
      %s68 = sadd.s32 %s67, 1
      %s69 = scalar_select %p66, %s67, %s68
      %p72 = pneg %p66
      %p73 = scmp.eq.s32.totalorder %s15, 1
      %p74 = por %p72, %p73
      %p75 = scmp.ne.s32.totalorder %s67, %s70
      %p76 = scmp.eq.s32.totalorder %s15, 0
      %p77 = por %p75, %p76
      %p78 = scmp.ne.s32.totalorder %s67, %s70
      %p79 = scmp.eq.s32.totalorder %s20, 1
      %p80 = por %p78, %p79
      %p81 = scmp.ne.s32.totalorder %s70, %s71
      %p82 = scmp.eq.s32.totalorder %s20, 0
      %p83 = por %p81, %p82
      %p84 = scmp.ne.s32.totalorder %s70, %s71
      %p85 = scmp.eq.s32.totalorder %s21, 1
      %p86 = por %p84, %p85
      %p88 = scmp.ne.s32.totalorder %s71, %s87
      %p89 = scmp.eq.s32.totalorder %s21, 0
      %p90 = por %p88, %p89
      %s92 = sadd.s32 %s91, 1
      %p95 = scmp.eq.s32.totalorder %s15, 1
      %p96 = scmp.ne.s32.totalorder %s91, %s93
      %p97 = scmp.eq.s32.totalorder %s15, 0
      %p98 = por %p96, %p97
      %p99 = scmp.ne.s32.totalorder %s91, %s93
      %p100 = scmp.eq.s32.totalorder %s20, 1
      %p101 = por %p99, %p100
      %p102 = scmp.ne.s32.totalorder %s93, %s94
      %p103 = scmp.eq.s32.totalorder %s20, 0
      %p104 = por %p102, %p103
      %p105 = scmp.ne.s32.totalorder %s93, %s94
      %p106 = scmp.eq.s32.totalorder %s21, 1
      %p107 = por %p105, %p106
      %p109 = scmp.ne.s32.totalorder %s94, %s108
      %p110 = scmp.eq.s32.totalorder %s21, 0
      %p111 = por %p109, %p110
      %s112 = ssub.s32 %s22, %s34
      %p113 = scmp.eq.s32.totalorder %s112, 0
      %s115 = sadd.s32 %s114, 1
      %s116 = scalar_select %p113, %s114, %s115
      %p119 = pneg %p113
      %p120 = scmp.eq.s32.totalorder %s15, 1
      %p121 = por %p119, %p120
      %p122 = scmp.ne.s32.totalorder %s114, %s117
      %p123 = scmp.eq.s32.totalorder %s15, 0
      %p124 = por %p122, %p123
      %p125 = scmp.ne.s32.totalorder %s114, %s117
      %p126 = scmp.eq.s32.totalorder %s20, 1
      %p127 = por %p125, %p126
      %p128 = scmp.ne.s32.totalorder %s117, %s118
      %p129 = scmp.eq.s32.totalorder %s20, 0
      %p130 = por %p128, %p129
      %p131 = scmp.ne.s32.totalorder %s117, %s118
      %p132 = scmp.eq.s32.totalorder %s21, 1
      %p133 = por %p131, %p132
      %p135 = scmp.ne.s32.totalorder %s118, %s134
      %p136 = scmp.eq.s32.totalorder %s21, 0
      %p137 = por %p135, %p136
      %p138 = scmp.le.s32.totalorder 1, %s15
      %p139 = scmp.lt.s32.totalorder %s15, 3
      %p140 = pnand %p138, %p139
      %p141 = pneg %p140
      // Predicated region
      $region9: #{tpu_custom_call.1} parent=5 // pred_check
        _
      $region10: #{tpu_custom_call.1} parent=5 // pred_check_branch
        %143 = sbr.rel (%p140) target = $region12
      $region11: #{tpu_custom_call.1} parent=5 // pred_region
        %s144 = ssub.s32 %s15, 1
        // Predicated region
        $region13: #{tpu_custom_call.1} parent=11 // pred_check
          %p145 = pneg %p104
        $region14: #{tpu_custom_call.1} parent=11 // pred_check_branch
          %147 = sbr.rel (%p145) target = $region16
        $region15: #{tpu_custom_call.1} parent=11 // pred_region
          _
        $region16: #{tpu_custom_call.1} parent=11 // pred_fallthru
          _
      $region12: #{tpu_custom_call.1} parent=5 // pred_fallthru
        _
      %p148 = scmp.lt.s32.totalorder %s15, 2
      // Predicated region
      $region17: #{tpu_custom_call.1} parent=5 // pred_check
        %p149 = pneg %p148
      $region18: #{tpu_custom_call.1} parent=5 // pred_check_branch
        %151 = sbr.rel (%p149) target = $region20
      $region19: #{tpu_custom_call.1} parent=5 // pred_region
        // Predicated region
        $region21: #{tpu_custom_call.1} parent=19 // pred_check
          %p152 = pneg %p49
        $region22: #{tpu_custom_call.1} parent=19 // pred_check_branch
          %154 = sbr.rel (%p152) target = $region24
        $region23: #{tpu_custom_call.1} parent=19 // pred_region
          %s155 = sand.u32 %s39, 1
          %s156 = scalar_lea.sflag [#allocation3], %s155
          %s157 = sand.u32 %s39, 1
          %s158 = smul.addr %s157, 4
          %s159 = scalar_lea.vmem [#allocation2], %s158
          %s160 = sadd.s32 %s22, %s23
          %s162 = ssub.s32 64, 64
          %163 = vsyncadd %s156, %s162
          %s164 = smul.addr %s160, 64
          %s165 = scalar_lea.hbm %s0, %s164
          %s167 = sshll.u32 %s159, 4
          %s168 = int_to_ptr.vmem [resolvable:$true] %s167
          %170 = dma.hbm_to_vmem [thread:$0]  %s165, 64, %s168, %s156
        $region24: #{tpu_custom_call.1} parent=19 // pred_fallthru
          _
        // Predicated region
        $region25: #{tpu_custom_call.1} parent=19 // pred_check
          %p171 = pneg %p77
        $region26: #{tpu_custom_call.1} parent=19 // pred_check_branch
          %173 = sbr.rel (%p171) target = $region28
        $region27: #{tpu_custom_call.1} parent=19 // pred_region
          %s174 = sadd.s32 %s22, %s23
          %p175 = scmp.lt.s32.totalorder %s174, 1
          %s176 = scalar_select %p175, %s174, 1
          %s177 = scalar_lea.vmem %s1, %s176
          %s178 = sadd.s32 %s22, %s23
        $region28: #{tpu_custom_call.1} parent=19 // pred_fallthru
          _
      $region20: #{tpu_custom_call.1} parent=5 // pred_fallthru
        _
      %p179 = scmp.le.s32.totalorder 1, %s15
      %p180 = scmp.lt.s32.totalorder %s15, 3
      %p181 = pnand %p179, %p180
      %p182 = pneg %p181
      // Predicated region
      $region29: #{tpu_custom_call.1} parent=5 // pred_check
        _
      $region30: #{tpu_custom_call.1} parent=5 // pred_check_branch
        %184 = sbr.rel (%p181) target = $region32
      $region31: #{tpu_custom_call.1} parent=5 // pred_region
        %s185 = ssub.s32 %s15, 1
        %s186 = sand.u32 %s42, 1
        %s187 = scalar_lea.sflag [#allocation3], %s186
        %s188 = sand.u32 %s42, 1
        %s189 = smul.addr %s188, 4
        %s190 = scalar_lea.vmem [#allocation2], %s189
        // Predicated region
        $region33: #{tpu_custom_call.1} parent=31 // pred_check
          %p191 = pneg %p55
        $region34: #{tpu_custom_call.1} parent=31 // pred_check_branch
          %193 = sbr.rel (%p191) target = $region36
        $region35: #{tpu_custom_call.1} parent=31 // pred_region
          %194 = dma.done %s187, 64
        $region36: #{tpu_custom_call.1} parent=31 // pred_fallthru
          _
        %s195 = sand.u32 %s42, 1
        %s196 = scalar_lea.sflag [#allocation3], %s195
        %s197 = sand.u32 %s42, 1
        %s198 = smul.addr %s197, 4
        %s199 = scalar_lea.vmem [#allocation2], %s198
        %p200 = pneg %p55
        %p201 = pneg %p52
        %s202 = sadd.s32 %s24, %s25
        %p203 = scmp.lt.s32.totalorder %s202, 1
        %s204 = scalar_select %p203, %s202, 1
        %s205 = scalar_lea.vmem %s1, %s204
        %p206 = pneg %p83
        %p207 = pneg %p80
        %p208 = pneg %p104
        %p209 = pneg %p101
        %p210 = pneg %p130
        %p211 = pneg %p127
        %s212 = sand.u32 %s117, 1
        %s213 = scalar_lea.sflag [#allocation4], %s212
        %s214 = sand.u32 %s117, 1
        %s215 = scalar_lea.vmem [#allocation5], %s214
        %s216 = sadd.s32 %s24, %s25
        %s217 = sadd.s32 %s24, %s25
        %p218 = scmp.lt.s32.totalorder %s217, 1
        %s219 = scalar_select %p218, %s217, 1
        %s220 = scalar_lea.vmem %s1, %s219
        %s221 = sadd.s32 %s24, %s25
        %p222 = scmp.eq.s32.totalorder %s25, 0
        // Predicated region
        $region37: #{tpu_custom_call.1} parent=31 // pred_check
          %p223 = pneg %p222
        $region38: #{tpu_custom_call.1} parent=31 // pred_check_branch
          %225 = sbr.rel (%p223) target = $region40
        $region39: #{tpu_custom_call.1} parent=31 // pred_region
          %226 = vst [vmem:[%s215] sm:$0x1] 0.0
        $region40: #{tpu_custom_call.1} parent=31 // pred_fallthru
          _
        %v227 = vld [vmem:[%s190] sm:$0xf]
        %v228 = vld [vmem:[%s220] sm:$0x1]
        %v229 = vld [vmem:[%s2] sm:$0xf]
        %vm230 = vcmask 1043456
        %v231 = vsel %vm230, %v227, -inf
        %v232 = vrot.slane %v231, 4
        %v233 = vmax.f32 %v231, %v232
        %v234 = vrot.slane %v233, 2
        %v235 = vmax.f32 %v233, %v234
        %v236 = vrot.slane %v235, 1
        %v237 = vmax.f32 %v235, %v236
        %v238 = vsub.f32 %v227, %v237
        %v239 = vmul.f32 %v238, 1.442695
        %v240 = vpow.pop %v239
        %v241 = vsel %vm230, %v240, 0.0
        %v242 = vrot.slane %v241, 4
        %v243 = vadd.f32 %v241, %v242
        %v244 = vrot.slane %v243, 2
        %v245 = vadd.f32 %v243, %v244
        %v246 = vrot.slane %v245, 1
        %v247 = vadd.f32 %v245, %v246
        %v248 = vlog2.pop %v247
        %v249 = vmul.f32 %v248, 0.6931472
        %v250 = vsub.f32 %v238, %v249
        %v251 = vlaneseq
        %v252 = vshrl.u32 %v251, 7
        %v253 = vlaneseq
        %v254 = vshrl.u32 %v253, 7
        %v255 = vsub.s32 0, %v254
        %v256 = vrot.slane %v228, %v255
        %vm257 = vcmp.eq.s32.totalorder %v252, %v256
        %v258 = vsel %vm257, 1, 0
        %v259 = vcvt.s32.f32 %v258
        %v260 = vmul.f32 %v250, %v259
        %v261 = vsel %vm230, %v260, 0.0
        %v262 = vrot.slane %v261, 4
        %v263 = vadd.f32 %v261, %v262
        %v264 = vrot.slane %v263, 2
        %v265 = vadd.f32 %v263, %v264
        %v266 = vrot.slane %v265, 1
        %v267 = vadd.f32 %v265, %v266
        %269 = vset.pattern.permute.xlu0 0
        %270 = vperm.xlu0 %269, %v229
        %v271 = vpop.permute.xlu0 %270
        %v273 = vmul.f32 %v271, %v259
        %v274 = vsel %vm230, %v273, 0.0
        %v275 = vrot.slane %v274, 4
        %v276 = vadd.f32 %v274, %v275
        %v277 = vrot.slane %v276, 2
        %v278 = vadd.f32 %v276, %v277
        %v279 = vrot.slane %v278, 1
        %v280 = vadd.f32 %v278, %v279
        %v281 = vmul.f32 %v267, 1.442695
        %v282 = vpow.pop %v281
        %v283 = vsub.f32 1.0, %v282
        %v284 = vmax.f32 %v283, 0.0
        %v285 = vmul.f32 %v284, %v284
        %v286 = vrsqrt.pop %v284
        %v287 = vmul.f32 %v284, %v286
        %vm288 = vcmp.eq.f32.partialorder %v284, inf
        %v289 = vsel %vm288, %v284, %v287
        %vm290 = vcmp.eq.f32.partialorder %v284, 0.0
        %v291 = vand.u32 %v284, 2147483648
        %v292 = vsel %vm290, %v291, %v289
        %v293 = vmul.f32 %v285, %v292
        %v294 = vsub.f32 0.0, %v280
        %v295 = vmul.f32 %v294, %v293
        %v296 = vmul.f32 %v295, %v267
        %v297 = vld [vmem:[%s215] sm:$0x1]
        %v298 = vadd.f32 %v297, %v296
        %299 = vst [vmem:[%s215] sm:$0x1] %v298
        %s300 = sand.u32 %s117, 1
        %s301 = scalar_lea.sflag [#allocation4], %s300
        %s302 = sand.u32 %s117, 1
        %s303 = scalar_lea.vmem [#allocation5], %s302
        // Predicated region
        $region41: #{tpu_custom_call.1} parent=31 // pred_check
          %p304 = pneg %p127
        $region42: #{tpu_custom_call.1} parent=31 // pred_check_branch
          %306 = sbr.rel (%p304) target = $region44
        $region43: #{tpu_custom_call.1} parent=31 // pred_region
          %s308 = ssub.s32 16, 16
          %309 = vsyncadd %s301, %s308
          %s310 = smul.addr %s24, 16
          %s311 = scalar_lea.hbm %s3, %s310
          %s313 = sshll.u32 %s303, 4
          %s314 = int_to_ptr.vmem [resolvable:$true] %s313
          %316 = dma.vmem_to_hbm [thread:$0]  %s314, 16, %s311, %s301
        $region44: #{tpu_custom_call.1} parent=31 // pred_fallthru
          _
      $region32: #{tpu_custom_call.1} parent=5 // pred_fallthru
        _
      %p317 = scmp.le.s32.totalorder 2, %s15
      // Predicated region
      $region45: #{tpu_custom_call.1} parent=5 // pred_check
        %p318 = pneg %p317
      $region46: #{tpu_custom_call.1} parent=5 // pred_check_branch
        %320 = sbr.rel (%p318) target = $region48
      $region47: #{tpu_custom_call.1} parent=5 // pred_region
        %s321 = ssub.s32 %s15, 2
        // Predicated region
        $region49: #{tpu_custom_call.1} parent=47 // pred_check
          %p322 = pneg %p133
        $region50: #{tpu_custom_call.1} parent=47 // pred_check_branch
          %324 = sbr.rel (%p322) target = $region52
        $region51: #{tpu_custom_call.1} parent=47 // pred_region
          %s325 = sand.u32 %s118, 1
          %s326 = scalar_lea.sflag [#allocation4], %s325
          %s327 = sand.u32 %s118, 1
          %s328 = scalar_lea.vmem [#allocation5], %s327
          %329 = dma.done %s326, 16
        $region52: #{tpu_custom_call.1} parent=47 // pred_fallthru
          _
      $region48: #{tpu_custom_call.1} parent=5 // pred_fallthru
        _
    $region6: #{tpu_custom_call.1} parent=1 // loop_footer
      %s19 = sadd.s32 1, %s15
    $region7: #{tpu_custom_call.1} parent=1 // loop_footer_branch
      %14 = sbr.rel target = $region3
    $region8: #{tpu_custom_call.1} parent=1 // loop_exit
      _
    %330 = vsyncpa [#allocation3], 1
    %s331 = scalar_lea.sflag [#allocation3], 1
    %332 = vsyncpa %s331, 1
    %333 = vsyncpa [#allocation4], 1
    %s334 = scalar_lea.sflag [#allocation4], 1
    %335 = vsyncpa %s334, 1

</llo_original>
